<compile_context>
chip_gen: v7x
topology: tpu7x:2x2x1
jax: 0.10.0
libtpu: 0.0.40
codegen_flags: <defaults>
</compile_context>

<pallas_src>
import jax
import jax.numpy as jnp
from jax.experimental import pallas as pl
from jax.experimental.pallas import tpu as pltpu


def cbam_kernel(x_ref, w_ref, b_ref, wc_ref, bc_ref, o_ref):
    # x_ref: (Bt, C, L) VMEM          w_ref: (C, C)  fused w2@w1 (VMEM, resident)
    # b_ref: (C, 1)   fused 2*(w2@b1+b2)
    # wc_ref: (2, K) SMEM spatial-conv weight    bc_ref: (1,) SMEM spatial-conv bias
    # o_ref: (Bt, C, L)
    f32 = jnp.float32
    x = x_ref[...].astype(f32)                     # (Bt, C, L)
    Bt, C, L = x.shape

    # ---------------- pooled channel stats ----------------
    # sum over L on the MXU (idle otherwise); max stays on the XLU.
    ones_L = jnp.ones((Bt, L, 1), f32)
    p_sum = jnp.einsum('bcl,blo->bco', x, ones_L,
                       preferred_element_type=f32)            # (Bt, C, 1)
    p_max = jnp.max(x, axis=2, keepdims=True)                  # (Bt, C, 1)
    p = p_sum * (1.0 / L) + p_max                              # p_avg + p_max

    # ---------------- fused channel-attention MLP ----------------
    # exact because this CBAM variant has no activation between the two 1x1 convs
    W = jnp.broadcast_to(w_ref[...], (Bt, C, C))
    z = jnp.einsum('bij,bjo->bio', W, p,
                   preferred_element_type=f32) + b_ref[...]    # (Bt, C, 1)
    ca = jax.nn.sigmoid(z)                                     # (Bt, C, 1)

    # ---------------- spatial stats ----------------
    ones_C = jnp.ones((Bt, 1, C), f32)
    s_sum = jnp.einsum('boc,bcl->bol', ones_C, x,
                       preferred_element_type=f32)             # (Bt, 1, L)  sum over C (MXU)
    s_max = jnp.max(x, axis=1, keepdims=True)                  # (Bt, 1, L)  max over C (XLU)
    s = jnp.concatenate([s_sum * (1.0 / C), s_max], axis=1)    # (Bt, 2, L) stacked (mean, max)

    # ---------------- K-tap spatial conv on the stacked pair ----------------
    K = wc_ref.shape[1]
    pad = K // 2
    lane = jax.lax.broadcasted_iota(jnp.int32, (1, 1, L), 2)
    row_is_mean = jax.lax.broadcasted_iota(jnp.int32, (1, 2, 1), 1) == 0
    acc = jnp.zeros((Bt, 2, L), f32)
    for j in range(K):                                         # static, unrolled
        d = j - pad
        w_col = jnp.where(row_is_mean, wc_ref[0, j], wc_ref[1, j])   # (1, 2, 1)
        if d == 0:
            t = s
        else:
            valid = (lane + d >= 0) & (lane + d < L)           # zero-padding boundary
            t = jnp.where(valid, pltpu.roll(s, shift=(-d) % L, axis=2), 0.0)
        acc = acc + w_col * t
    conv = jnp.sum(acc, axis=1, keepdims=True) + bc_ref[0]     # (Bt, 1, L)
    sa = jax.nn.sigmoid(conv)                                  # (Bt, 1, L)

    # ---------------- apply both gates ----------------
    o_ref[...] = (x * ca * sa).astype(o_ref.dtype)


def cbam_forward(x, w1, b1, w2, b2, wc, bc, *, num_grid_steps=None):
    """x: (B, C, L). w1: (C//r, C), b1: (C//r,), w2: (C, C//r), b2: (C,),
    wc: (2, K) spatial conv weight, bc: (1,) spatial conv bias.

    num_grid_steps: number of grid steps over batch. Default 2 (when B is even)
    so both TensorCores are fed on v7x; use 1 on single-TC v5e/v6e to fold the
    whole batch into one block.
    """
    B, C, L = x.shape
    K = wc.shape[1]

    # Fuse the two 1x1 convs:  mlp(avg)+mlp(max) = (w2@w1)(p_avg+p_max) + 2*(w2@b1+b2)
    Wf = (w2.astype(jnp.float32) @ w1.astype(jnp.float32))                 # (C, C)
    bfv = 2.0 * (w2.astype(jnp.float32) @ b1.astype(jnp.float32)
                 + b2.astype(jnp.float32)).reshape(C, 1)                   # (C, 1)

    if num_grid_steps is None:
        num_grid_steps = 2 if (B >= 2 and B % 2 == 0) else 1
    nb = num_grid_steps
    assert B % nb == 0, "num_grid_steps must divide the batch"
    Bt = B // nb

    itemsize = jnp.dtype(x.dtype).itemsize
    flops = int(B * (4 * C * L + 2 * C * C + 4 * K * L + 4 * C * L))
    transcendentals = int(B * (C + L))
    bytes_accessed = int(itemsize * 2 * B * C * L + 4 * (C * C + C + 2 * K + 1))

    out = pl.pallas_call(
        cbam_kernel,
        out_shape=jax.ShapeDtypeStruct((B, C, L), x.dtype),
        grid_spec=pltpu.PrefetchScalarGridSpec(
            num_scalar_prefetch=0,
            grid=(nb,),
            in_specs=[
                pl.BlockSpec((Bt, C, L), lambda i: (i, 0, 0)),      # x slab (lane-dense in L)
                pl.BlockSpec((C, C), lambda i: (0, 0)),             # fused MLP weight (resident)
                pl.BlockSpec((C, 1), lambda i: (0, 0)),             # fused MLP bias  (resident)
                pl.BlockSpec(memory_space=pltpu.MemorySpace.SMEM),  # spatial conv weight (2, K)
                pl.BlockSpec(memory_space=pltpu.MemorySpace.SMEM),  # spatial conv bias (1,)
            ],
            out_specs=pl.BlockSpec((Bt, C, L), lambda i: (i, 0, 0)),
        ),
        compiler_params=pltpu.CompilerParams(
            dimension_semantics=("parallel",),
        ),
        cost_estimate=pl.CostEstimate(
            flops=flops,
            transcendentals=transcendentals,
            bytes_accessed=bytes_accessed,
        ),
    )(x, Wf, bfv, wc.astype(jnp.float32), bc.reshape(1).astype(jnp.float32))
    return out


def init_cbam_params(key, c1, r=16, k=7):
    """Mimics torch Conv1d default init (uniform +-1/sqrt(fan_in*kernel))."""
    c_ = c1 // r
    ks = jax.random.split(key, 6)
    bnd1 = 1.0 / (c1 ** 0.5)          # Conv1d(c1 -> c_, kernel 1)
    bnd2 = 1.0 / (c_ ** 0.5)          # Conv1d(c_ -> c1, kernel 1)
    bndc = 1.0 / ((2 * k) ** 0.5)     # Conv1d(2 -> 1, kernel k)
    w1 = jax.random.uniform(ks[0], (c_, c1), jnp.float32, -bnd1, bnd1)
    b1 = jax.random.uniform(ks[1], (c_,), jnp.float32, -bnd1, bnd1)
    w2 = jax.random.uniform(ks[2], (c1, c_), jnp.float32, -bnd2, bnd2)
    b2 = jax.random.uniform(ks[3], (c1,), jnp.float32, -bnd2, bnd2)
    wc = jax.random.uniform(ks[4], (2, k), jnp.float32, -bndc, bndc)
    bc = jax.random.uniform(ks[5], (1,), jnp.float32, -bndc, bndc)
    return w1, b1, w2, b2, wc, bc


def cbam_reference(x, w1, b1, w2, b2, wc, bc):
    """Pure-JAX reference matching the PyTorch module (unfused)."""
    B, C, L = x.shape
    x = x.astype(jnp.float32)
    p_avg = jnp.mean(x, axis=2)                 # (B, C)
    p_max = jnp.max(x, axis=2)                  # (B, C)

    def mlp(p):
        return (p @ w1.T + b1) @ w2.T + b2      # (B, C)

    ca = jax.nn.sigmoid(mlp(p_avg) + mlp(p_max))[:, :, None]   # (B, C, 1)
    x1 = ca * x

    s_mean = jnp.mean(x, axis=1)                # (B, L)
    s_max = jnp.max(x, axis=1)                  # (B, L)
    K = wc.shape[1]
    pad = K // 2
    sm_p = jnp.pad(s_mean, ((0, 0), (pad, pad)))
    sx_p = jnp.pad(s_max, ((0, 0), (pad, pad)))
    conv = jnp.zeros((B, L), jnp.float32) + bc[0]
    for j in range(K):
        conv = conv + wc[0, j] * sm_p[:, j:j + L] + wc[1, j] * sx_p[:, j:j + L]
    sa = jax.nn.sigmoid(conv)[:, None, :]       # (B, 1, L)
    return sa * x1


if __name__ == "__main__":
    key = jax.random.PRNGKey(0)
    kx, kp = jax.random.split(key)

    B, C, L = 2, 64, 128          # batch=2, channels=64, sequence length=128
    r, k = 16, 7                  # reduction ratio, spatial conv kernel size

    x = jax.random.normal(kx, (B, C, L), dtype=jnp.float32)
    w1, b1, w2, b2, wc, bc = init_cbam_params(kp, C, r=r, k=k)

    # f32 path
    out = jax.block_until_ready(cbam_forward(x, w1, b1, w2, b2, wc, bc))
    ref = cbam_reference(x, w1, b1, w2, b2, wc, bc)
    assert out.shape == x.shape
    assert jnp.allclose(out, ref, atol=1e-4, rtol=1e-4), "f32 mismatch vs reference"

    # bf16 I/O path (halves HBM traffic; in-kernel compute stays f32)
    x_bf = x.astype(jnp.bfloat16)
    out_bf = jax.block_until_ready(cbam_forward(x_bf, w1, b1, w2, b2, wc, bc))
    ref_bf = cbam_reference(x_bf.astype(jnp.float32), w1, b1, w2, b2, wc, bc)
    assert out_bf.dtype == jnp.bfloat16
    assert jnp.allclose(out_bf.astype(jnp.float32), ref_bf, atol=2e-2, rtol=2e-2), \
        "bf16 mismatch vs reference"

    print("KERNEL_OK")
</pallas_src>

<mosaic_0001>
module attributes {stable_mosaic.version = 11 : i64} {
  func.func @cbam_kernel(%arg0: i32, %arg1: memref<1x64x128xf32, #tpu.memory_space<vmem>>, %arg2: memref<64x64xf32, #tpu.memory_space<vmem>>, %arg3: memref<64x1xf32, #tpu.memory_space<vmem>>, %arg4: memref<2x7xf32, #tpu.memory_space<smem>>, %arg5: memref<1xf32, #tpu.memory_space<smem>>, %arg6: memref<1x64x128xf32, #tpu.memory_space<vmem>>) attributes {dimension_semantics = [#tpu.dimension_semantics<parallel>], iteration_bounds = array<i64: 2>, scalar_prefetch = 0 : i64, scratch_operands = 0 : i64, tpu.core_type = #tpu.core_type<tc>, window_params = [{transform_indices = @transform_0, window_bounds = array<i64: 1, 64, 128>}, {pipeline_mode = #tpu.pipeline_mode<synchronous>, transform_indices = @transform_1, window_bounds = array<i64: 64, 64>}, {pipeline_mode = #tpu.pipeline_mode<synchronous>, transform_indices = @transform_2, window_bounds = array<i64: 64, 1>}, {transform_indices = @transform_3, window_bounds = array<i64: 2, 7>}, {transform_indices = @transform_4, window_bounds = array<i64: 1>}, {transform_indices = @transform_5, window_bounds = array<i64: 1, 64, 128>}]} {
    %c0 = arith.constant 0 : index
    %c0_0 = arith.constant 0 : index
    %c0_1 = arith.constant 0 : index
    %0 = vector.load %arg1[%c0, %c0_0, %c0_1] : memref<1x64x128xf32, #tpu.memory_space<vmem>>, vector<1x64x128xf32>
    %cst = arith.constant 1.000000e+00 : f32
    %1 = vector.broadcast %cst : f32 to vector<1x128x1xf32>
    "tpu.trace_start"() <{level = 10 : i32, message = "bcl,blo->bco"}> : () -> ()
    %cst_2 = arith.constant dense<0.000000e+00> : vector<1x64x1xf32>
    %2 = tpu.matmul %0, %1, %cst_2 {dimension_numbers = #tpu.dot_dimension_numbers<[2], [1], [1], [2], [0, 0, 0, 1, 1, 2], [0], [0]>} : vector<1x64x128xf32>, vector<1x128x1xf32>, vector<1x64x1xf32> -> vector<1x64x1xf32>
    "tpu.trace_stop"() : () -> ()
    %cst_3 = arith.constant dense<0xFF800000> : vector<1x64xf32>
    %3 = vector.multi_reduction <maximumf>, %0, %cst_3 [2] : vector<1x64x128xf32> to vector<1x64xf32>
    %4 = vector.shape_cast %3 : vector<1x64xf32> to vector<1x64x1xf32>
    %cst_4 = arith.constant 7.812500e-03 : f32
    %5 = vector.broadcast %cst_4 : f32 to vector<1x64x1xf32>
    %6 = arith.mulf %2, %5 : vector<1x64x1xf32>
    %7 = arith.addf %6, %4 : vector<1x64x1xf32>
    %c0_5 = arith.constant 0 : index
    %c0_6 = arith.constant 0 : index
    %8 = vector.load %arg2[%c0_5, %c0_6] : memref<64x64xf32, #tpu.memory_space<vmem>>, vector<64x64xf32>
    %9 = vector.shape_cast %8 : vector<64x64xf32> to vector<1x64x64xf32>
    "tpu.trace_start"() <{level = 10 : i32, message = "bij,bjo->bio"}> : () -> ()
    %cst_7 = arith.constant dense<0.000000e+00> : vector<1x64x1xf32>
    %10 = tpu.matmul %9, %7, %cst_7 {dimension_numbers = #tpu.dot_dimension_numbers<[2], [1], [1], [2], [0, 0, 0, 1, 1, 2], [0], [0]>} : vector<1x64x64xf32>, vector<1x64x1xf32>, vector<1x64x1xf32> -> vector<1x64x1xf32>
    "tpu.trace_stop"() : () -> ()
    %c0_8 = arith.constant 0 : index
    %c0_9 = arith.constant 0 : index
    %11 = vector.load %arg3[%c0_8, %c0_9] : memref<64x1xf32, #tpu.memory_space<vmem>>, vector<64x1xf32>
    %12 = vector.shape_cast %11 : vector<64x1xf32> to vector<1x64x1xf32>
    %13 = arith.addf %10, %12 : vector<1x64x1xf32>
    %14 = arith.negf %13 : vector<1x64x1xf32>
    %15 = math.exp %14 : vector<1x64x1xf32>
    %cst_10 = arith.constant 1.000000e+00 : f32
    %16 = vector.broadcast %cst_10 : f32 to vector<1x64x1xf32>
    %17 = arith.addf %16, %15 : vector<1x64x1xf32>
    %18 = arith.divf %16, %17 : vector<1x64x1xf32>
    %cst_11 = arith.constant 1.000000e+00 : f32
    %19 = vector.broadcast %cst_11 : f32 to vector<1x1x64xf32>
    "tpu.trace_start"() <{level = 10 : i32, message = "boc,bcl->bol"}> : () -> ()
    %cst_12 = arith.constant dense<0.000000e+00> : vector<1x1x128xf32>
    %20 = tpu.matmul %19, %0, %cst_12 {dimension_numbers = #tpu.dot_dimension_numbers<[2], [1], [1], [2], [0, 0, 0, 1, 1, 2], [0], [0]>} : vector<1x1x64xf32>, vector<1x64x128xf32>, vector<1x1x128xf32> -> vector<1x1x128xf32>
    "tpu.trace_stop"() : () -> ()
    %cst_13 = arith.constant dense<0xFF800000> : vector<1x128xf32>
    %21 = vector.multi_reduction <maximumf>, %0, %cst_13 [1] : vector<1x64x128xf32> to vector<1x128xf32>
    %22 = vector.shape_cast %21 : vector<1x128xf32> to vector<1x1x128xf32>
    %cst_14 = arith.constant 1.562500e-02 : f32
    %23 = vector.broadcast %cst_14 : f32 to vector<1x1x128xf32>
    %24 = arith.mulf %20, %23 : vector<1x1x128xf32>
    %25 = tpu.concatenate %24, %22 in 1 : vector<1x1x128xf32>, vector<1x1x128xf32> -> vector<1x2x128xf32>
    %26 = tpu.iota {dimensions = array<i32: 2>} : vector<1x1x128xi32>
    %27 = tpu.iota {dimensions = array<i32: 1>} : vector<1x2x1xi32>
    %c0_i32 = arith.constant 0 : i32
    %28 = vector.broadcast %c0_i32 : i32 to vector<1x2x1xi32>
    %29 = arith.cmpi eq, %27, %28 : vector<1x2x1xi32>
    %cst_15 = arith.constant 0.000000e+00 : f32
    %30 = vector.broadcast %cst_15 : f32 to vector<1x2x128xf32>
    %c0_16 = arith.constant 0 : index
    %c0_17 = arith.constant 0 : index
    %31 = memref.load %arg4[%c0_16, %c0_17] : memref<2x7xf32, #tpu.memory_space<smem>>
    %c1 = arith.constant 1 : index
    %c0_18 = arith.constant 0 : index
    %32 = memref.load %arg4[%c1, %c0_18] : memref<2x7xf32, #tpu.memory_space<smem>>
    %33 = vector.broadcast %31 : f32 to vector<1x2x1xf32>
    %34 = vector.broadcast %32 : f32 to vector<1x2x1xf32>
    %35 = arith.select %29, %33, %34 : vector<1x2x1xi1>, vector<1x2x1xf32>
    %c-3_i32 = arith.constant -3 : i32
    %36 = vector.broadcast %c-3_i32 : i32 to vector<1x1x128xi32>
    %37 = arith.addi %26, %36 : vector<1x1x128xi32>
    %c0_i32_19 = arith.constant 0 : i32
    %38 = vector.broadcast %c0_i32_19 : i32 to vector<1x1x128xi32>
    %39 = arith.cmpi sge, %37, %38 : vector<1x1x128xi32>
    %c-3_i32_20 = arith.constant -3 : i32
    %40 = vector.broadcast %c-3_i32_20 : i32 to vector<1x1x128xi32>
    %41 = arith.addi %26, %40 : vector<1x1x128xi32>
    %c128_i32 = arith.constant 128 : i32
    %42 = vector.broadcast %c128_i32 : i32 to vector<1x1x128xi32>
    %43 = arith.cmpi slt, %41, %42 : vector<1x1x128xi32>
    %44 = arith.andi %39, %43 : vector<1x1x128xi1>
    %c3_i32 = arith.constant 3 : i32
    %45 = tpu.dynamic_rotate %25 by %c3_i32 dim 2 : vector<1x2x128xf32>, i32 -> vector<1x2x128xf32>
    %cst_21 = arith.constant 0.000000e+00 : f32
    %46 = vector.shape_cast %44 : vector<1x1x128xi1> to vector<1x1x128xi1>
    %47 = vector.broadcast %46 : vector<1x1x128xi1> to vector<1x2x128xi1>
    %48 = vector.broadcast %cst_21 : f32 to vector<1x2x128xf32>
    %49 = arith.select %47, %45, %48 : vector<1x2x128xi1>, vector<1x2x128xf32>
    %50 = vector.broadcast %35 : vector<1x2x1xf32> to vector<1x2x128xf32>
    %51 = arith.mulf %50, %49 : vector<1x2x128xf32>
    %52 = arith.addf %30, %51 : vector<1x2x128xf32>
    %c0_22 = arith.constant 0 : index
    %c1_23 = arith.constant 1 : index
    %53 = memref.load %arg4[%c0_22, %c1_23] : memref<2x7xf32, #tpu.memory_space<smem>>
    %c1_24 = arith.constant 1 : index
    %c1_25 = arith.constant 1 : index
    %54 = memref.load %arg4[%c1_24, %c1_25] : memref<2x7xf32, #tpu.memory_space<smem>>
    %55 = vector.broadcast %53 : f32 to vector<1x2x1xf32>
    %56 = vector.broadcast %54 : f32 to vector<1x2x1xf32>
    %57 = arith.select %29, %55, %56 : vector<1x2x1xi1>, vector<1x2x1xf32>
    %c-2_i32 = arith.constant -2 : i32
    %58 = vector.broadcast %c-2_i32 : i32 to vector<1x1x128xi32>
    %59 = arith.addi %26, %58 : vector<1x1x128xi32>
    %c0_i32_26 = arith.constant 0 : i32
    %60 = vector.broadcast %c0_i32_26 : i32 to vector<1x1x128xi32>
    %61 = arith.cmpi sge, %59, %60 : vector<1x1x128xi32>
    %c-2_i32_27 = arith.constant -2 : i32
    %62 = vector.broadcast %c-2_i32_27 : i32 to vector<1x1x128xi32>
    %63 = arith.addi %26, %62 : vector<1x1x128xi32>
    %c128_i32_28 = arith.constant 128 : i32
    %64 = vector.broadcast %c128_i32_28 : i32 to vector<1x1x128xi32>
    %65 = arith.cmpi slt, %63, %64 : vector<1x1x128xi32>
    %66 = arith.andi %61, %65 : vector<1x1x128xi1>
    %c2_i32 = arith.constant 2 : i32
    %67 = tpu.dynamic_rotate %25 by %c2_i32 dim 2 : vector<1x2x128xf32>, i32 -> vector<1x2x128xf32>
    %cst_29 = arith.constant 0.000000e+00 : f32
    %68 = vector.shape_cast %66 : vector<1x1x128xi1> to vector<1x1x128xi1>
    %69 = vector.broadcast %68 : vector<1x1x128xi1> to vector<1x2x128xi1>
    %70 = vector.broadcast %cst_29 : f32 to vector<1x2x128xf32>
    %71 = arith.select %69, %67, %70 : vector<1x2x128xi1>, vector<1x2x128xf32>
    %72 = vector.broadcast %57 : vector<1x2x1xf32> to vector<1x2x128xf32>
    %73 = arith.mulf %72, %71 : vector<1x2x128xf32>
    %74 = arith.addf %52, %73 : vector<1x2x128xf32>
    %c0_30 = arith.constant 0 : index
    %c2 = arith.constant 2 : index
    %75 = memref.load %arg4[%c0_30, %c2] : memref<2x7xf32, #tpu.memory_space<smem>>
    %c1_31 = arith.constant 1 : index
    %c2_32 = arith.constant 2 : index
    %76 = memref.load %arg4[%c1_31, %c2_32] : memref<2x7xf32, #tpu.memory_space<smem>>
    %77 = vector.broadcast %75 : f32 to vector<1x2x1xf32>
    %78 = vector.broadcast %76 : f32 to vector<1x2x1xf32>
    %79 = arith.select %29, %77, %78 : vector<1x2x1xi1>, vector<1x2x1xf32>
    %c-1_i32 = arith.constant -1 : i32
    %80 = vector.broadcast %c-1_i32 : i32 to vector<1x1x128xi32>
    %81 = arith.addi %26, %80 : vector<1x1x128xi32>
    %c0_i32_33 = arith.constant 0 : i32
    %82 = vector.broadcast %c0_i32_33 : i32 to vector<1x1x128xi32>
    %83 = arith.cmpi sge, %81, %82 : vector<1x1x128xi32>
    %c-1_i32_34 = arith.constant -1 : i32
    %84 = vector.broadcast %c-1_i32_34 : i32 to vector<1x1x128xi32>
    %85 = arith.addi %26, %84 : vector<1x1x128xi32>
    %c128_i32_35 = arith.constant 128 : i32
    %86 = vector.broadcast %c128_i32_35 : i32 to vector<1x1x128xi32>
    %87 = arith.cmpi slt, %85, %86 : vector<1x1x128xi32>
    %88 = arith.andi %83, %87 : vector<1x1x128xi1>
    %c1_i32 = arith.constant 1 : i32
    %89 = tpu.dynamic_rotate %25 by %c1_i32 dim 2 : vector<1x2x128xf32>, i32 -> vector<1x2x128xf32>
    %cst_36 = arith.constant 0.000000e+00 : f32
    %90 = vector.shape_cast %88 : vector<1x1x128xi1> to vector<1x1x128xi1>
    %91 = vector.broadcast %90 : vector<1x1x128xi1> to vector<1x2x128xi1>
    %92 = vector.broadcast %cst_36 : f32 to vector<1x2x128xf32>
    %93 = arith.select %91, %89, %92 : vector<1x2x128xi1>, vector<1x2x128xf32>
    %94 = vector.broadcast %79 : vector<1x2x1xf32> to vector<1x2x128xf32>
    %95 = arith.mulf %94, %93 : vector<1x2x128xf32>
    %96 = arith.addf %74, %95 : vector<1x2x128xf32>
    %c0_37 = arith.constant 0 : index
    %c3 = arith.constant 3 : index
    %97 = memref.load %arg4[%c0_37, %c3] : memref<2x7xf32, #tpu.memory_space<smem>>
    %c1_38 = arith.constant 1 : index
    %c3_39 = arith.constant 3 : index
    %98 = memref.load %arg4[%c1_38, %c3_39] : memref<2x7xf32, #tpu.memory_space<smem>>
    %99 = vector.broadcast %97 : f32 to vector<1x2x1xf32>
    %100 = vector.broadcast %98 : f32 to vector<1x2x1xf32>
    %101 = arith.select %29, %99, %100 : vector<1x2x1xi1>, vector<1x2x1xf32>
    %102 = vector.broadcast %101 : vector<1x2x1xf32> to vector<1x2x128xf32>
    %103 = arith.mulf %102, %25 : vector<1x2x128xf32>
    %104 = arith.addf %96, %103 : vector<1x2x128xf32>
    %c0_40 = arith.constant 0 : index
    %c4 = arith.constant 4 : index
    %105 = memref.load %arg4[%c0_40, %c4] : memref<2x7xf32, #tpu.memory_space<smem>>
    %c1_41 = arith.constant 1 : index
    %c4_42 = arith.constant 4 : index
    %106 = memref.load %arg4[%c1_41, %c4_42] : memref<2x7xf32, #tpu.memory_space<smem>>
    %107 = vector.broadcast %105 : f32 to vector<1x2x1xf32>
    %108 = vector.broadcast %106 : f32 to vector<1x2x1xf32>
    %109 = arith.select %29, %107, %108 : vector<1x2x1xi1>, vector<1x2x1xf32>
    %c1_i32_43 = arith.constant 1 : i32
    %110 = vector.broadcast %c1_i32_43 : i32 to vector<1x1x128xi32>
    %111 = arith.addi %26, %110 : vector<1x1x128xi32>
    %c0_i32_44 = arith.constant 0 : i32
    %112 = vector.broadcast %c0_i32_44 : i32 to vector<1x1x128xi32>
    %113 = arith.cmpi sge, %111, %112 : vector<1x1x128xi32>
    %c1_i32_45 = arith.constant 1 : i32
    %114 = vector.broadcast %c1_i32_45 : i32 to vector<1x1x128xi32>
    %115 = arith.addi %26, %114 : vector<1x1x128xi32>
    %c128_i32_46 = arith.constant 128 : i32
    %116 = vector.broadcast %c128_i32_46 : i32 to vector<1x1x128xi32>
    %117 = arith.cmpi slt, %115, %116 : vector<1x1x128xi32>
    %118 = arith.andi %113, %117 : vector<1x1x128xi1>
    %c127_i32 = arith.constant 127 : i32
    %119 = tpu.dynamic_rotate %25 by %c127_i32 dim 2 : vector<1x2x128xf32>, i32 -> vector<1x2x128xf32>
    %cst_47 = arith.constant 0.000000e+00 : f32
    %120 = vector.shape_cast %118 : vector<1x1x128xi1> to vector<1x1x128xi1>
    %121 = vector.broadcast %120 : vector<1x1x128xi1> to vector<1x2x128xi1>
    %122 = vector.broadcast %cst_47 : f32 to vector<1x2x128xf32>
    %123 = arith.select %121, %119, %122 : vector<1x2x128xi1>, vector<1x2x128xf32>
    %124 = vector.broadcast %109 : vector<1x2x1xf32> to vector<1x2x128xf32>
    %125 = arith.mulf %124, %123 : vector<1x2x128xf32>
    %126 = arith.addf %104, %125 : vector<1x2x128xf32>
    %c0_48 = arith.constant 0 : index
    %c5 = arith.constant 5 : index
    %127 = memref.load %arg4[%c0_48, %c5] : memref<2x7xf32, #tpu.memory_space<smem>>
    %c1_49 = arith.constant 1 : index
    %c5_50 = arith.constant 5 : index
    %128 = memref.load %arg4[%c1_49, %c5_50] : memref<2x7xf32, #tpu.memory_space<smem>>
    %129 = vector.broadcast %127 : f32 to vector<1x2x1xf32>
    %130 = vector.broadcast %128 : f32 to vector<1x2x1xf32>
    %131 = arith.select %29, %129, %130 : vector<1x2x1xi1>, vector<1x2x1xf32>
    %c2_i32_51 = arith.constant 2 : i32
    %132 = vector.broadcast %c2_i32_51 : i32 to vector<1x1x128xi32>
    %133 = arith.addi %26, %132 : vector<1x1x128xi32>
    %c0_i32_52 = arith.constant 0 : i32
    %134 = vector.broadcast %c0_i32_52 : i32 to vector<1x1x128xi32>
    %135 = arith.cmpi sge, %133, %134 : vector<1x1x128xi32>
    %c2_i32_53 = arith.constant 2 : i32
    %136 = vector.broadcast %c2_i32_53 : i32 to vector<1x1x128xi32>
    %137 = arith.addi %26, %136 : vector<1x1x128xi32>
    %c128_i32_54 = arith.constant 128 : i32
    %138 = vector.broadcast %c128_i32_54 : i32 to vector<1x1x128xi32>
    %139 = arith.cmpi slt, %137, %138 : vector<1x1x128xi32>
    %140 = arith.andi %135, %139 : vector<1x1x128xi1>
    %c126_i32 = arith.constant 126 : i32
    %141 = tpu.dynamic_rotate %25 by %c126_i32 dim 2 : vector<1x2x128xf32>, i32 -> vector<1x2x128xf32>
    %cst_55 = arith.constant 0.000000e+00 : f32
    %142 = vector.shape_cast %140 : vector<1x1x128xi1> to vector<1x1x128xi1>
    %143 = vector.broadcast %142 : vector<1x1x128xi1> to vector<1x2x128xi1>
    %144 = vector.broadcast %cst_55 : f32 to vector<1x2x128xf32>
    %145 = arith.select %143, %141, %144 : vector<1x2x128xi1>, vector<1x2x128xf32>
    %146 = vector.broadcast %131 : vector<1x2x1xf32> to vector<1x2x128xf32>
    %147 = arith.mulf %146, %145 : vector<1x2x128xf32>
    %148 = arith.addf %126, %147 : vector<1x2x128xf32>
    %c0_56 = arith.constant 0 : index
    %c6 = arith.constant 6 : index
    %149 = memref.load %arg4[%c0_56, %c6] : memref<2x7xf32, #tpu.memory_space<smem>>
    %c1_57 = arith.constant 1 : index
    %c6_58 = arith.constant 6 : index
    %150 = memref.load %arg4[%c1_57, %c6_58] : memref<2x7xf32, #tpu.memory_space<smem>>
    %151 = vector.broadcast %149 : f32 to vector<1x2x1xf32>
    %152 = vector.broadcast %150 : f32 to vector<1x2x1xf32>
    %153 = arith.select %29, %151, %152 : vector<1x2x1xi1>, vector<1x2x1xf32>
    %c3_i32_59 = arith.constant 3 : i32
    %154 = vector.broadcast %c3_i32_59 : i32 to vector<1x1x128xi32>
    %155 = arith.addi %26, %154 : vector<1x1x128xi32>
    %c0_i32_60 = arith.constant 0 : i32
    %156 = vector.broadcast %c0_i32_60 : i32 to vector<1x1x128xi32>
    %157 = arith.cmpi sge, %155, %156 : vector<1x1x128xi32>
    %c3_i32_61 = arith.constant 3 : i32
    %158 = vector.broadcast %c3_i32_61 : i32 to vector<1x1x128xi32>
    %159 = arith.addi %26, %158 : vector<1x1x128xi32>
    %c128_i32_62 = arith.constant 128 : i32
    %160 = vector.broadcast %c128_i32_62 : i32 to vector<1x1x128xi32>
    %161 = arith.cmpi slt, %159, %160 : vector<1x1x128xi32>
    %162 = arith.andi %157, %161 : vector<1x1x128xi1>
    %c125_i32 = arith.constant 125 : i32
    %163 = tpu.dynamic_rotate %25 by %c125_i32 dim 2 : vector<1x2x128xf32>, i32 -> vector<1x2x128xf32>
    %cst_63 = arith.constant 0.000000e+00 : f32
    %164 = vector.shape_cast %162 : vector<1x1x128xi1> to vector<1x1x128xi1>
    %165 = vector.broadcast %164 : vector<1x1x128xi1> to vector<1x2x128xi1>
    %166 = vector.broadcast %cst_63 : f32 to vector<1x2x128xf32>
    %167 = arith.select %165, %163, %166 : vector<1x2x128xi1>, vector<1x2x128xf32>
    %168 = vector.broadcast %153 : vector<1x2x1xf32> to vector<1x2x128xf32>
    %169 = arith.mulf %168, %167 : vector<1x2x128xf32>
    %170 = arith.addf %148, %169 : vector<1x2x128xf32>
    %cst_64 = arith.constant dense<0.000000e+00> : vector<1x128xf32>
    %171 = vector.multi_reduction <add>, %170, %cst_64 [1] : vector<1x2x128xf32> to vector<1x128xf32>
    %172 = vector.shape_cast %171 : vector<1x128xf32> to vector<1x1x128xf32>
    %c0_65 = arith.constant 0 : index
    %173 = memref.load %arg5[%c0_65] : memref<1xf32, #tpu.memory_space<smem>>
    %174 = vector.broadcast %173 : f32 to vector<1x1x128xf32>
    %175 = arith.addf %172, %174 : vector<1x1x128xf32>
    %176 = arith.negf %175 : vector<1x1x128xf32>
    %177 = math.exp %176 : vector<1x1x128xf32>
    %cst_66 = arith.constant 1.000000e+00 : f32
    %178 = vector.broadcast %cst_66 : f32 to vector<1x1x128xf32>
    %179 = arith.addf %178, %177 : vector<1x1x128xf32>
    %180 = arith.divf %178, %179 : vector<1x1x128xf32>
    %181 = vector.broadcast %18 : vector<1x64x1xf32> to vector<1x64x128xf32>
    %182 = arith.mulf %0, %181 : vector<1x64x128xf32>
    %183 = vector.broadcast %180 : vector<1x1x128xf32> to vector<1x64x128xf32>
    %184 = arith.mulf %182, %183 : vector<1x64x128xf32>
    %c0_67 = arith.constant 0 : index
    %c0_68 = arith.constant 0 : index
    %c0_69 = arith.constant 0 : index
    %185 = vector.load %arg6[%c0_67, %c0_68, %c0_69] : memref<1x64x128xf32, #tpu.memory_space<vmem>>, vector<1x64x128xf32>
    tpu.vector_store %arg6[%c0_67, %c0_68, %c0_69], %184 {strides = array<i32>} : memref<1x64x128xf32, #tpu.memory_space<vmem>>, vector<1x64x128xf32>,
    return
  }
  func.func @transform_0(%arg0: i32) -> (i32, i32, i32) {
    %c0_i32 = arith.constant 0 : i32
    %c0_i32_0 = arith.constant 0 : i32
    %c0_i32_1 = arith.constant 0 : i32
    return %arg0, %c0_i32, %c0_i32_0 : i32, i32, i32
  }
  func.func @transform_1(%arg0: i32) -> (i32, i32) {
    %c0_i32 = arith.constant 0 : i32
    %c0_i32_0 = arith.constant 0 : i32
    %c0_i32_1 = arith.constant 0 : i32
    return %c0_i32, %c0_i32_0 : i32, i32
  }
  func.func @transform_2(%arg0: i32) -> (i32, i32) {
    %c0_i32 = arith.constant 0 : i32
    %c0_i32_0 = arith.constant 0 : i32
    %c0_i32_1 = arith.constant 0 : i32
    return %c0_i32, %c0_i32_0 : i32, i32
  }
  func.func @transform_3(%arg0: i32) -> (i32, i32) {
    %c0_i32 = arith.constant 0 : i32
    %c0_i32_0 = arith.constant 0 : i32
    %c0_i32_1 = arith.constant 0 : i32
    return %c0_i32, %c0_i32_0 : i32, i32
  }
  func.func @transform_4(%arg0: i32) -> i32 {
    %c0_i32 = arith.constant 0 : i32
    %c0_i32_0 = arith.constant 0 : i32
    return %c0_i32 : i32
  }
  func.func @transform_5(%arg0: i32) -> (i32, i32, i32) {
    %c0_i32 = arith.constant 0 : i32
    %c0_i32_0 = arith.constant 0 : i32
    %c0_i32_1 = arith.constant 0 : i32
    return %arg0, %c0_i32, %c0_i32_0 : i32, i32, i32
  }
}

</mosaic_0001>

<llo_original>
// kernel: tpu_custom_call.1
$region0: #{tpu_custom_call.1}
  #allocation0 [shape = 'u32[]', space=smem, size = 0x4, offset = 0x4, fixed_abs, tag = 'smem constant byte address 0x4 - core index']
  #allocation1 [shape = 'u32[144,128]{1,0:T(1,128)}', space=vmem, size = 0x12000, scoped, tag = 'internal scratch']
  #allocation2 [shape = 'f32[1]{0:T(128)S(6)}', space=smem, size = 0x200, scoped, tag = 'scoped memory for tpu_custom_call.1']
  %s0 = inlined_call_operand.hbm [shape: f32[2,64,128], index: 0, kind: input, shape index: {}]
  %s1 = inlined_call_operand.vmem [shape: f32[64,64], index: 1, kind: input, shape index: {}]
  %s2 = inlined_call_operand.vmem [shape: f32[64,1], index: 2, kind: input, shape index: {}]
  %s3 = inlined_call_operand.vmem [shape: f32[2,7], index: 3, kind: input, shape index: {}]
  %s4 = inlined_call_operand.<no memory space> [shape: f32[1], index: 4, kind: input, shape index: {}]
  %s5 = inlined_call_operand.hbm [shape: f32[2,64,128], index: 5, kind: output, shape index: {}]
  %s6 = sld [smem:[#allocation0]]
  $region61: #{tpu_custom_call.1} parent=0
    _
  %s8 = ssub.s32 1, %s6
  %s9 = scalar_select 0, %s8, %s6
  %10 = sst [smem:[#allocation2]] %s4
  $region1: #{tpu_custom_call.1} parent=0
    #allocation3 [shape = 'u8[65536]{0}', space=vmem, size = 0x10000, scoped, tag = 'input window, operand 0']
    #allocation4 [shape = 's32[2]{0}', space=sflag, size = 0x8, scoped, tag = 'scoped memory for tpu_custom_call.1']
    #allocation5 [shape = 's32[2]{0}', space=sflag, size = 0x8, scoped, tag = 'scoped memory for tpu_custom_call.1']
    #allocation6 [shape = 's32[2]{0}', space=sflag, size = 0x8, scoped, tag = 'scoped memory for tpu_custom_call.1']
    #allocation7 [shape = 'u8[1024]{0}', space=smem, size = 0x400, scoped, tag = 'input window, operand 3, single buffered']
    #allocation8 [shape = 'u8[65536]{0}', space=vmem, size = 0x10000, scoped, tag = 'output window, operand 0']
    %11 = vsyncpa [#allocation4], 0
    %s12 = scalar_lea.sflag [#allocation4], 1
    %13 = vsyncpa %s12, 0
    %14 = vsyncpa [#allocation6], 0
    %15 = vsyncpa [#allocation5], 0
    %s16 = scalar_lea.sflag [#allocation5], 1
    %17 = vsyncpa %s16, 0
    loop: start=0, step=1, limit=4
    $region2: #{tpu_custom_call.1} parent=1 // loop_pre_header
      _
    $region3: #{tpu_custom_call.1} parent=1 // loop_header
      %s19 = sphi 0, %s23
      %p20 = scmp.ge.s32.totalorder %s19, 4
      %s29 = sphi 0, %s31
      %s32 = sphi 0, %s29
      %s33 = sphi 0, %s32
      %s49 = sphi 0, %s33
      %s53 = sphi 0, %s53
      %s55 = sphi 0, %s53
      %s56 = sphi 0, %s55
      %s70 = sphi 0, %s56
      %s74 = sphi 0, %s74
      %s76 = sphi 0, %s74
      %s77 = sphi 0, %s76
      %s91 = sphi 0, %s77
      %s95 = sphi 0, %s95
      %s97 = sphi 0, %s95
      %s98 = sphi 0, %s97
      %s112 = sphi 0, %s98
      %s116 = sphi 0, %s116
      %s118 = sphi 0, %s116
      %s119 = sphi 0, %s118
      %s133 = sphi 0, %s119
      %s139 = sphi 0, %s141
      %s142 = sphi 0, %s139
      %s143 = sphi 0, %s142
      %s159 = sphi 0, %s143
    $region4: #{tpu_custom_call.1} parent=1 // loop_header_branch
      %22 = sbr.rel (%p20) target = $region8
    $region5: #{tpu_custom_call.1} parent=1 // loop_body
      %s24 = ssub.s32 %s19, 1
      %s25 = ssub.s32 %s19, 2
      %s26 = sadd.s32 %s19, 1
      %s27 = ssub.s32 %s19, %s26
      %p28 = scmp.eq.s32.totalorder %s27, 0
      %s30 = sadd.s32 %s29, 1
      %s31 = scalar_select %p28, %s29, %s30
      %p34 = pneg %p28
      %p35 = scmp.eq.s32.totalorder %s19, 1
      %p36 = por %p34, %p35
      %p37 = scmp.ne.s32.totalorder %s29, %s32
      %p38 = scmp.eq.s32.totalorder %s19, 0
      %p39 = por %p37, %p38
      %p40 = scmp.ne.s32.totalorder %s29, %s32
      %p41 = scmp.eq.s32.totalorder %s24, 1
      %p42 = por %p40, %p41
      %p43 = scmp.ne.s32.totalorder %s32, %s33
      %p44 = scmp.eq.s32.totalorder %s24, 0
      %p45 = por %p43, %p44
      %p46 = scmp.ne.s32.totalorder %s32, %s33
      %p47 = scmp.eq.s32.totalorder %s25, 1
      %p48 = por %p46, %p47
      %p50 = scmp.ne.s32.totalorder %s33, %s49
      %p51 = scmp.eq.s32.totalorder %s25, 0
      %p52 = por %p50, %p51
      %s54 = sadd.s32 %s53, 1
      %p57 = scmp.eq.s32.totalorder %s19, 1
      %p58 = scmp.ne.s32.totalorder %s53, %s55
      %p59 = scmp.eq.s32.totalorder %s19, 0
      %p60 = por %p58, %p59
      %p61 = scmp.ne.s32.totalorder %s53, %s55
      %p62 = scmp.eq.s32.totalorder %s24, 1
      %p63 = por %p61, %p62
      %p64 = scmp.ne.s32.totalorder %s55, %s56
      %p65 = scmp.eq.s32.totalorder %s24, 0
      %p66 = por %p64, %p65
      %p67 = scmp.ne.s32.totalorder %s55, %s56
      %p68 = scmp.eq.s32.totalorder %s25, 1
      %p69 = por %p67, %p68
      %p71 = scmp.ne.s32.totalorder %s56, %s70
      %p72 = scmp.eq.s32.totalorder %s25, 0
      %p73 = por %p71, %p72
      %s75 = sadd.s32 %s74, 1
      %p78 = scmp.eq.s32.totalorder %s19, 1
      %p79 = scmp.ne.s32.totalorder %s74, %s76
      %p80 = scmp.eq.s32.totalorder %s19, 0
      %p81 = por %p79, %p80
      %p82 = scmp.ne.s32.totalorder %s74, %s76
      %p83 = scmp.eq.s32.totalorder %s24, 1
      %p84 = por %p82, %p83
      %p85 = scmp.ne.s32.totalorder %s76, %s77
      %p86 = scmp.eq.s32.totalorder %s24, 0
      %p87 = por %p85, %p86
      %p88 = scmp.ne.s32.totalorder %s76, %s77
      %p89 = scmp.eq.s32.totalorder %s25, 1
      %p90 = por %p88, %p89
      %p92 = scmp.ne.s32.totalorder %s77, %s91
      %p93 = scmp.eq.s32.totalorder %s25, 0
      %p94 = por %p92, %p93
      %s96 = sadd.s32 %s95, 1
      %p99 = scmp.eq.s32.totalorder %s19, 1
      %p100 = scmp.ne.s32.totalorder %s95, %s97
      %p101 = scmp.eq.s32.totalorder %s19, 0
      %p102 = por %p100, %p101
      %p103 = scmp.ne.s32.totalorder %s95, %s97
      %p104 = scmp.eq.s32.totalorder %s24, 1
      %p105 = por %p103, %p104
      %p106 = scmp.ne.s32.totalorder %s97, %s98
      %p107 = scmp.eq.s32.totalorder %s24, 0
      %p108 = por %p106, %p107
      %p109 = scmp.ne.s32.totalorder %s97, %s98
      %p110 = scmp.eq.s32.totalorder %s25, 1
      %p111 = por %p109, %p110
      %p113 = scmp.ne.s32.totalorder %s98, %s112
      %p114 = scmp.eq.s32.totalorder %s25, 0
      %p115 = por %p113, %p114
      %s117 = sadd.s32 %s116, 1
      %p120 = scmp.eq.s32.totalorder %s19, 1
      %p121 = scmp.ne.s32.totalorder %s116, %s118
      %p122 = scmp.eq.s32.totalorder %s19, 0
      %p123 = por %p121, %p122
      %p124 = scmp.ne.s32.totalorder %s116, %s118
      %p125 = scmp.eq.s32.totalorder %s24, 1
      %p126 = por %p124, %p125
      %p127 = scmp.ne.s32.totalorder %s118, %s119
      %p128 = scmp.eq.s32.totalorder %s24, 0
      %p129 = por %p127, %p128
      %p130 = scmp.ne.s32.totalorder %s118, %s119
      %p131 = scmp.eq.s32.totalorder %s25, 1
      %p132 = por %p130, %p131
      %p134 = scmp.ne.s32.totalorder %s119, %s133
      %p135 = scmp.eq.s32.totalorder %s25, 0
      %p136 = por %p134, %p135
      %s137 = ssub.s32 %s19, %s26
      %p138 = scmp.eq.s32.totalorder %s137, 0
      %s140 = sadd.s32 %s139, 1
      %s141 = scalar_select %p138, %s139, %s140
      %p144 = pneg %p138
      %p145 = scmp.eq.s32.totalorder %s19, 1
      %p146 = por %p144, %p145
      %p147 = scmp.ne.s32.totalorder %s139, %s142
      %p148 = scmp.eq.s32.totalorder %s19, 0
      %p149 = por %p147, %p148
      %p150 = scmp.ne.s32.totalorder %s139, %s142
      %p151 = scmp.eq.s32.totalorder %s24, 1
      %p152 = por %p150, %p151
      %p153 = scmp.ne.s32.totalorder %s142, %s143
      %p154 = scmp.eq.s32.totalorder %s24, 0
      %p155 = por %p153, %p154
      %p156 = scmp.ne.s32.totalorder %s142, %s143
      %p157 = scmp.eq.s32.totalorder %s25, 1
      %p158 = por %p156, %p157
      %p160 = scmp.ne.s32.totalorder %s143, %s159
      %p161 = scmp.eq.s32.totalorder %s25, 0
      %p162 = por %p160, %p161
      %p163 = scmp.le.s32.totalorder 1, %s19
      %p164 = scmp.lt.s32.totalorder %s19, 3
      %p165 = pnand %p163, %p164
      %p166 = pneg %p165
      // Predicated region
      $region9: #{tpu_custom_call.1} parent=5 // pred_check
        _
      $region10: #{tpu_custom_call.1} parent=5 // pred_check_branch
        %168 = sbr.rel (%p165) target = $region12
      $region11: #{tpu_custom_call.1} parent=5 // pred_region
        %s169 = ssub.s32 %s19, 1
        // Predicated region
        $region13: #{tpu_custom_call.1} parent=11 // pred_check
          %p170 = pneg %p66
        $region14: #{tpu_custom_call.1} parent=11 // pred_check_branch
          %172 = sbr.rel (%p170) target = $region16
        $region15: #{tpu_custom_call.1} parent=11 // pred_region
          _
        $region16: #{tpu_custom_call.1} parent=11 // pred_fallthru
          _
        // Predicated region
        $region17: #{tpu_custom_call.1} parent=11 // pred_check
          %p173 = pneg %p87
        $region18: #{tpu_custom_call.1} parent=11 // pred_check_branch
          %175 = sbr.rel (%p173) target = $region20
        $region19: #{tpu_custom_call.1} parent=11 // pred_region
          _
        $region20: #{tpu_custom_call.1} parent=11 // pred_fallthru
          _
        // Predicated region
        $region21: #{tpu_custom_call.1} parent=11 // pred_check
          %p176 = pneg %p108
        $region22: #{tpu_custom_call.1} parent=11 // pred_check_branch
          %178 = sbr.rel (%p176) target = $region24
        $region23: #{tpu_custom_call.1} parent=11 // pred_region
          %s180 = ssub.s32 32, 32
          %181 = vsyncadd [#allocation6], %s180
          %s183 = sshll.u32 %s3, 4
          %s184 = int_to_ptr.vmem [resolvable:$true] %s183
          %186 = dma.vmem_to_smem %s184, 32, [#allocation7], [#allocation6]
        $region24: #{tpu_custom_call.1} parent=11 // pred_fallthru
          _
        // Predicated region
        $region25: #{tpu_custom_call.1} parent=11 // pred_check
          %p187 = pneg %p129
        $region26: #{tpu_custom_call.1} parent=11 // pred_check_branch
          %189 = sbr.rel (%p187) target = $region28
        $region27: #{tpu_custom_call.1} parent=11 // pred_region
          _
        $region28: #{tpu_custom_call.1} parent=11 // pred_fallthru
          _
      $region12: #{tpu_custom_call.1} parent=5 // pred_fallthru
        _
      %p190 = scmp.lt.s32.totalorder %s19, 2
      // Predicated region
      $region29: #{tpu_custom_call.1} parent=5 // pred_check
        %p191 = pneg %p190
      $region30: #{tpu_custom_call.1} parent=5 // pred_check_branch
        %193 = sbr.rel (%p191) target = $region32
      $region31: #{tpu_custom_call.1} parent=5 // pred_region
        // Predicated region
        $region33: #{tpu_custom_call.1} parent=31 // pred_check
          %p194 = pneg %p39
        $region34: #{tpu_custom_call.1} parent=31 // pred_check_branch
          %196 = sbr.rel (%p194) target = $region36
        $region35: #{tpu_custom_call.1} parent=31 // pred_region
          %s197 = sand.u32 %s29, 1
          %s198 = scalar_lea.sflag [#allocation4], %s197
          %s199 = sand.u32 %s29, 1
          %s200 = smul.addr %s199, 64
          %s201 = scalar_lea.vmem [#allocation3], %s200
          %s203 = ssub.s32 1024, 1024
          %204 = vsyncadd %s198, %s203
          %s205 = smul.addr %s19, 8
          %s206 = smul.addr %s205, 128
          %s207 = scalar_lea.hbm %s0, %s206
          %s208 = sshll.u32 %s201, 4
          %s209 = int_to_ptr.vmem [resolvable:$true] %s208
          %214 = dma.hbm_to_vmem [thread:$0]  %s207, 1024, %s209, %s198, 128, 128, 8
        $region36: #{tpu_custom_call.1} parent=31 // pred_fallthru
          _
      $region32: #{tpu_custom_call.1} parent=5 // pred_fallthru
        _
      %p215 = scmp.le.s32.totalorder 1, %s19
      %p216 = scmp.lt.s32.totalorder %s19, 3
      %p217 = pnand %p215, %p216
      %p218 = pneg %p217
      // Predicated region
      $region37: #{tpu_custom_call.1} parent=5 // pred_check
        _
      $region38: #{tpu_custom_call.1} parent=5 // pred_check_branch
        %220 = sbr.rel (%p217) target = $region40
      $region39: #{tpu_custom_call.1} parent=5 // pred_region
        %s221 = ssub.s32 %s19, 1
        %s222 = sand.u32 %s32, 1
        %s223 = scalar_lea.sflag [#allocation4], %s222
        %s224 = sand.u32 %s32, 1
        %s225 = smul.addr %s224, 64
        %s226 = scalar_lea.vmem [#allocation3], %s225
        // Predicated region
        $region41: #{tpu_custom_call.1} parent=39 // pred_check
          %p227 = pneg %p45
        $region42: #{tpu_custom_call.1} parent=39 // pred_check_branch
          %229 = sbr.rel (%p227) target = $region44
        $region43: #{tpu_custom_call.1} parent=39 // pred_region
          %230 = dma.done %s223, 1024
        $region44: #{tpu_custom_call.1} parent=39 // pred_fallthru
          _
        // Predicated region
        $region45: #{tpu_custom_call.1} parent=39 // pred_check
          %p231 = pneg %p108
        $region46: #{tpu_custom_call.1} parent=39 // pred_check_branch
          %233 = sbr.rel (%p231) target = $region48
        $region47: #{tpu_custom_call.1} parent=39 // pred_region
          %234 = dma.done [#allocation6], 32
        $region48: #{tpu_custom_call.1} parent=39 // pred_fallthru
          _
        %235 = sfence
        %s236 = sand.u32 %s32, 1
        %s237 = scalar_lea.sflag [#allocation4], %s236
        %s238 = sand.u32 %s32, 1
        %s239 = smul.addr %s238, 64
        %s240 = scalar_lea.vmem [#allocation3], %s239
        %p241 = pneg %p45
        %p242 = pneg %p42
        %p243 = pneg %p66
        %p244 = pneg %p63
        %p245 = pneg %p87
        %p246 = pneg %p84
        %p247 = pneg %p108
        %p248 = pneg %p105
        %p249 = pneg %p129
        %p250 = pneg %p126
        %p251 = pneg %p155
        %p252 = pneg %p152
        %s253 = sand.u32 %s142, 1
        %s254 = scalar_lea.sflag [#allocation5], %s253
        %s255 = sand.u32 %s142, 1
        %s256 = smul.addr %s255, 64
        %s257 = scalar_lea.vmem [#allocation8], %s256
        %v258 = vld [vmem:[%s226] sm:$0xff]
        %v259 = vld [vmem:[%s226 + $0x8] sm:$0xff]
        %v260 = vld [vmem:[%s226 + $0x10] sm:$0xff]
        %v261 = vld [vmem:[%s226 + $0x18] sm:$0xff]
        %v262 = vld [vmem:[%s226 + $0x20] sm:$0xff]
        %v263 = vld [vmem:[%s226 + $0x28] sm:$0xff]
        %v264 = vld [vmem:[%s226 + $0x30] sm:$0xff]
        %v265 = vld [vmem:[%s226 + $0x38] sm:$0xff]
        %266 = vmatprep.subr.mxu0 0.0
        %267 = vmatpush1.msra.mxu0 1.0
        %268 = vmatprep.subr.mxu0 0.0
        %269 = vmatpush1.msra.mxu0 1.0
        %270 = vmatprep.subr.mxu0 0.0
        %271 = vmatpush1.msra.mxu0 1.0
        %272 = vmatprep.subr.mxu0 0.0
        %273 = vmatpush1.msra.mxu0 1.0
        %274 = vmatprep.subr.mxu0 0.0
        %275 = vmatpush1.msra.mxu0 1.0
        %276 = vmatprep.subr.mxu0 0.0
        %277 = vmatpush1.msra.mxu0 1.0
        %278 = vmatprep.subr.mxu0 0.0
        %279 = vmatpush1.msra.mxu0 1.0
        %280 = vmatprep.subr.mxu0 0.0
        %281 = vmatpush1.msra.mxu0 1.0
        %282 = vmatprep.subr.mxu0 0.0
        %283 = vmatpush1.msra.mxu0 1.0
        %284 = vmatprep.subr.mxu0 0.0
        %285 = vmatpush1.msra.mxu0 1.0
        %286 = vmatprep.subr.mxu0 0.0
        %287 = vmatpush1.msra.mxu0 1.0
        %288 = vmatprep.subr.mxu0 0.0
        %289 = vmatpush1.msra.mxu0 1.0
        %290 = vmatprep.subr.mxu0 0.0
        %291 = vmatpush1.msra.mxu0 1.0
        %292 = vmatprep.subr.mxu0 0.0
        %293 = vmatpush1.msra.mxu0 1.0
        %294 = vmatprep.subr.mxu0 0.0
        %295 = vmatpush1.msra.mxu0 1.0
        %296 = vmatprep.subr.mxu0 0.0
        %297 = vmatpush1.msra.mxu0 1.0
        %298 = vmatprep.subr.mxu0 0.0
        %299 = vmatpush1.msra.mxu0 0.0
        %300 = vmatprep.subr.mxu0 0.0
        %301 = vmatpush1.msra.mxu0 0.0
        %302 = vmatprep.subr.mxu0 0.0
        %303 = vmatpush1.msra.mxu0 0.0
        %304 = vmatprep.subr.mxu0 0.0
        %305 = vmatpush1.msra.mxu0 0.0
        %306 = vmatprep.subr.mxu0 0.0
        %307 = vmatpush1.msra.mxu0 0.0
        %308 = vmatprep.subr.mxu0 0.0
        %309 = vmatpush1.msra.mxu0 0.0
        %310 = vmatprep.subr.mxu0 0.0
        %311 = vmatpush1.msra.mxu0 0.0
        %312 = vmatprep.subr.mxu0 0.0
        %313 = vmatpush1.msra.mxu0 0.0
        %314 = vmatprep.subr.mxu0 0.0
        %315 = vmatpush1.msra.mxu0 0.0
        %316 = vmatprep.subr.mxu0 0.0
        %317 = vmatpush1.msra.mxu0 0.0
        %318 = vmatprep.subr.mxu0 0.0
        %319 = vmatpush1.msra.mxu0 0.0
        %320 = vmatprep.subr.mxu0 0.0
        %321 = vmatpush1.msra.mxu0 0.0
        %322 = vmatprep.subr.mxu0 0.0
        %323 = vmatpush1.msra.mxu0 0.0
        %324 = vmatprep.subr.mxu0 0.0
        %325 = vmatpush1.msra.mxu0 0.0
        %326 = vmatprep.subr.mxu0 0.0
        %327 = vmatpush1.msra.mxu0 0.0
        %328 = vmatprep.subr.mxu0 0.0
        %329 = vmatpush1.msra.mxu0 0.0
        %330 = vmatprep.mubr.f32.mxu0 0.0
        %331 = vmatmul.mubr.f32.gmra.mrb[0].mxu0 %v258
        %v332 = vpop.f32.mrb[0].mxu0
        %v333 = vadd.f32 0.0, %v332
        %v334 = vpop.f32.mrb[0].mxu0
        %335 = vmatprep.mubr.f32.mxu0 0.0
        %336 = vmatmul.mubr.f32.gmra.mrb[0].mxu0 %v259
        %v337 = vpop.f32.mrb[0].mxu0
        %v338 = vadd.f32 0.0, %v337
        %v339 = vpop.f32.mrb[0].mxu0
        %340 = vmatprep.mubr.f32.mxu0 0.0
        %341 = vmatmul.mubr.f32.gmra.mrb[0].mxu0 %v260
        %v342 = vpop.f32.mrb[0].mxu0
        %v343 = vadd.f32 0.0, %v342
        %v344 = vpop.f32.mrb[0].mxu0
        %345 = vmatprep.mubr.f32.mxu0 0.0
        %346 = vmatmul.mubr.f32.gmra.mrb[0].mxu0 %v261
        %v347 = vpop.f32.mrb[0].mxu0
        %v348 = vadd.f32 0.0, %v347
        %v349 = vpop.f32.mrb[0].mxu0
        %350 = vmatprep.mubr.f32.mxu0 0.0
        %351 = vmatmul.mubr.f32.gmra.mrb[0].mxu0 %v262
        %v352 = vpop.f32.mrb[0].mxu0
        %v353 = vadd.f32 0.0, %v352
        %v354 = vpop.f32.mrb[0].mxu0
        %355 = vmatprep.mubr.f32.mxu0 0.0
        %356 = vmatmul.mubr.f32.gmra.mrb[0].mxu0 %v263
        %v357 = vpop.f32.mrb[0].mxu0
        %v358 = vadd.f32 0.0, %v357
        %v359 = vpop.f32.mrb[0].mxu0
        %360 = vmatprep.mubr.f32.mxu0 0.0
        %361 = vmatmul.mubr.f32.gmra.mrb[0].mxu0 %v264
        %v362 = vpop.f32.mrb[0].mxu0
        %v363 = vadd.f32 0.0, %v362
        %v364 = vpop.f32.mrb[0].mxu0
        %365 = vmatprep.mubr.f32.mxu0 0.0
        %366 = vmatmul.mubr.f32.gmra.mrb[0].mxu0 %v265
        %v367 = vpop.f32.mrb[0].mxu0
        %v368 = vadd.f32 0.0, %v367
        %v369 = vpop.f32.mrb[0].mxu0
        %370 = vdwg.mxu0
        %371 = vmax.xlane.f32.xlu0 %v258
        %v372 = vpop.xlane.xlu0 %371
        %373 = vmax.xlane.f32.xlu0 %v259
        %v374 = vpop.xlane.xlu0 %373
        %375 = vmax.xlane.f32.xlu0 %v260
        %v376 = vpop.xlane.xlu0 %375
        %377 = vmax.xlane.f32.xlu0 %v261
        %v378 = vpop.xlane.xlu0 %377
        %379 = vmax.xlane.f32.xlu0 %v262
        %v380 = vpop.xlane.xlu0 %379
        %381 = vmax.xlane.f32.xlu0 %v263
        %v382 = vpop.xlane.xlu0 %381
        %383 = vmax.xlane.f32.xlu0 %v264
        %v384 = vpop.xlane.xlu0 %383
        %385 = vmax.xlane.f32.xlu0 %v265
        %v386 = vpop.xlane.xlu0 %385
        %v387 = vmul.f32 %v333, 0.0078125
        %v388 = vmul.f32 %v338, 0.0078125
        %v389 = vmul.f32 %v343, 0.0078125
        %v390 = vmul.f32 %v348, 0.0078125
        %v391 = vmul.f32 %v353, 0.0078125
        %v392 = vmul.f32 %v358, 0.0078125
        %v393 = vmul.f32 %v363, 0.0078125
        %v394 = vmul.f32 %v368, 0.0078125
        %v395 = vadd.f32 %v387, %v372
        %v396 = vadd.f32 %v388, %v374
        %v397 = vadd.f32 %v389, %v376
        %v398 = vadd.f32 %v390, %v378
        %v399 = vadd.f32 %v391, %v380
        %v400 = vadd.f32 %v392, %v382
        %v401 = vadd.f32 %v393, %v384
        %v402 = vadd.f32 %v394, %v386
        %v403 = vld [vmem:[%s1] sm:$0xff]
        %v404 = vld [vmem:[%s1 + $0x8] sm:$0xff]
        %v405 = vld [vmem:[%s1 + $0x10] sm:$0xff]
        %v406 = vld [vmem:[%s1 + $0x18] sm:$0xff]
        %v407 = vld [vmem:[%s1 + $0x20] sm:$0xff]
        %v408 = vld [vmem:[%s1 + $0x28] sm:$0xff]
        %v409 = vld [vmem:[%s1 + $0x30] sm:$0xff]
        %v410 = vld [vmem:[%s1 + $0x38] sm:$0xff]
        %v411 = vld [vmem:[%s2] sm:$0xff]
        %v412 = vld [vmem:[%s2 + $0x8] sm:$0xff]
        %v413 = vld [vmem:[%s2 + $0x10] sm:$0xff]
        %v414 = vld [vmem:[%s2 + $0x18] sm:$0xff]
        %v415 = vld [vmem:[%s2 + $0x20] sm:$0xff]
        %v416 = vld [vmem:[%s2 + $0x28] sm:$0xff]
        %v417 = vld [vmem:[%s2 + $0x30] sm:$0xff]
        %v418 = vld [vmem:[%s2 + $0x38] sm:$0xff]
        %vm419 = vcmask 523264
        %v421 = vsel %vm419, %v403, 0
        %v424 = vsel %vm419, %v404, 0
        %v427 = vsel %vm419, %v405, 0
        %v430 = vsel %vm419, %v406, 0
        %v433 = vsel %vm419, %v407, 0
        %v436 = vsel %vm419, %v408, 0
        %v439 = vsel %vm419, %v409, 0
        %v442 = vsel %vm419, %v410, 0
        %444 = vmatprep.subr.mxu0 0.0
        %445 = vmatpush1.msra.mxu0 %v395
        %446 = vmatprep.subr.mxu0 0.0
        %447 = vmatpush1.msra.mxu0 %v396
        %448 = vmatprep.subr.mxu0 0.0
        %449 = vmatpush1.msra.mxu0 %v397
        %450 = vmatprep.subr.mxu0 0.0
        %451 = vmatpush1.msra.mxu0 %v398
        %452 = vmatprep.subr.mxu0 0.0
        %453 = vmatpush1.msra.mxu0 %v399
        %454 = vmatprep.subr.mxu0 0.0
        %455 = vmatpush1.msra.mxu0 %v400
        %456 = vmatprep.subr.mxu0 0.0
        %457 = vmatpush1.msra.mxu0 %v401
        %458 = vmatprep.subr.mxu0 0.0
        %459 = vmatpush1.msra.mxu0 %v402
        %460 = vmatprep.subr.mxu0 0.0
        %461 = vmatpush1.msra.mxu0 0.0
        %462 = vmatprep.subr.mxu0 0.0
        %463 = vmatpush1.msra.mxu0 0.0
        %464 = vmatprep.subr.mxu0 0.0
        %465 = vmatpush1.msra.mxu0 0.0
        %466 = vmatprep.subr.mxu0 0.0
        %467 = vmatpush1.msra.mxu0 0.0
        %468 = vmatprep.subr.mxu0 0.0
        %469 = vmatpush1.msra.mxu0 0.0
        %470 = vmatprep.subr.mxu0 0.0
        %471 = vmatpush1.msra.mxu0 0.0
        %472 = vmatprep.subr.mxu0 0.0
        %473 = vmatpush1.msra.mxu0 0.0
        %474 = vmatprep.subr.mxu0 0.0
        %475 = vmatpush1.msra.mxu0 0.0
        %476 = vmatprep.subr.mxu0 0.0
        %477 = vmatpush1.msra.mxu0 0.0
        %478 = vmatprep.subr.mxu0 0.0
        %479 = vmatpush1.msra.mxu0 0.0
        %480 = vmatprep.subr.mxu0 0.0
        %481 = vmatpush1.msra.mxu0 0.0
        %482 = vmatprep.subr.mxu0 0.0
        %483 = vmatpush1.msra.mxu0 0.0
        %484 = vmatprep.subr.mxu0 0.0
        %485 = vmatpush1.msra.mxu0 0.0
        %486 = vmatprep.subr.mxu0 0.0
        %487 = vmatpush1.msra.mxu0 0.0
        %488 = vmatprep.subr.mxu0 0.0
        %489 = vmatpush1.msra.mxu0 0.0
        %490 = vmatprep.subr.mxu0 0.0
        %491 = vmatpush1.msra.mxu0 0.0
        %492 = vmatprep.subr.mxu0 0.0
        %493 = vmatpush1.msra.mxu0 0.0
        %494 = vmatprep.subr.mxu0 0.0
        %495 = vmatpush1.msra.mxu0 0.0
        %496 = vmatprep.subr.mxu0 0.0
        %497 = vmatpush1.msra.mxu0 0.0
        %498 = vmatprep.subr.mxu0 0.0
        %499 = vmatpush1.msra.mxu0 0.0
        %500 = vmatprep.subr.mxu0 0.0
        %501 = vmatpush1.msra.mxu0 0.0
        %502 = vmatprep.subr.mxu0 0.0
        %503 = vmatpush1.msra.mxu0 0.0
        %504 = vmatprep.subr.mxu0 0.0
        %505 = vmatpush1.msra.mxu0 0.0
        %506 = vmatprep.subr.mxu0 0.0
        %507 = vmatpush1.msra.mxu0 0.0
        %508 = vmatprep.mubr.f32.mxu0 0.0
        %509 = vmatmul.mubr.f32.gmra.mrb[0].mxu0 %v421
        %v510 = vpop.f32.mrb[0].mxu0
        %v511 = vadd.f32 %v411, %v510
        %v512 = vpop.f32.mrb[0].mxu0
        %513 = vmatprep.mubr.f32.mxu0 0.0
        %514 = vmatmul.mubr.f32.gmra.mrb[0].mxu0 %v424
        %v515 = vpop.f32.mrb[0].mxu0
        %v516 = vadd.f32 %v412, %v515
        %v517 = vpop.f32.mrb[0].mxu0
        %518 = vmatprep.mubr.f32.mxu0 0.0
        %519 = vmatmul.mubr.f32.gmra.mrb[0].mxu0 %v427
        %v520 = vpop.f32.mrb[0].mxu0
        %v521 = vadd.f32 %v413, %v520
        %v522 = vpop.f32.mrb[0].mxu0
        %523 = vmatprep.mubr.f32.mxu0 0.0
        %524 = vmatmul.mubr.f32.gmra.mrb[0].mxu0 %v430
        %v525 = vpop.f32.mrb[0].mxu0
        %v526 = vadd.f32 %v414, %v525
        %v527 = vpop.f32.mrb[0].mxu0
        %528 = vmatprep.mubr.f32.mxu0 0.0
        %529 = vmatmul.mubr.f32.gmra.mrb[0].mxu0 %v433
        %v530 = vpop.f32.mrb[0].mxu0
        %v531 = vadd.f32 %v415, %v530
        %v532 = vpop.f32.mrb[0].mxu0
        %533 = vmatprep.mubr.f32.mxu0 0.0
        %534 = vmatmul.mubr.f32.gmra.mrb[0].mxu0 %v436
        %v535 = vpop.f32.mrb[0].mxu0
        %v536 = vadd.f32 %v416, %v535
        %v537 = vpop.f32.mrb[0].mxu0
        %538 = vmatprep.mubr.f32.mxu0 0.0
        %539 = vmatmul.mubr.f32.gmra.mrb[0].mxu0 %v439
        %v540 = vpop.f32.mrb[0].mxu0
        %v541 = vadd.f32 %v417, %v540
        %v542 = vpop.f32.mrb[0].mxu0
        %543 = vmatprep.mubr.f32.mxu0 0.0
        %544 = vmatmul.mubr.f32.gmra.mrb[0].mxu0 %v442
        %v545 = vpop.f32.mrb[0].mxu0
        %v546 = vadd.f32 %v418, %v545
        %v547 = vpop.f32.mrb[0].mxu0
        %548 = vdwg.mxu0
        %v549 = vxor.u32 %v511, 2147483648
        %v550 = vxor.u32 %v516, 2147483648
        %v551 = vxor.u32 %v521, 2147483648
        %v552 = vxor.u32 %v526, 2147483648
        %v553 = vxor.u32 %v531, 2147483648
        %v554 = vxor.u32 %v536, 2147483648
        %v555 = vxor.u32 %v541, 2147483648
        %v556 = vxor.u32 %v546, 2147483648
        %v557 = vmul.f32 %v549, 1.442695
        %v558 = vpow.pop %v557
        %v559 = vmul.f32 %v550, 1.442695
        %v560 = vpow.pop %v559
        %v561 = vmul.f32 %v551, 1.442695
        %v562 = vpow.pop %v561
        %v563 = vmul.f32 %v552, 1.442695
        %v564 = vpow.pop %v563
        %v565 = vmul.f32 %v553, 1.442695
        %v566 = vpow.pop %v565
        %v567 = vmul.f32 %v554, 1.442695
        %v568 = vpow.pop %v567
        %v569 = vmul.f32 %v555, 1.442695
        %v570 = vpow.pop %v569
        %v571 = vmul.f32 %v556, 1.442695
        %v572 = vpow.pop %v571
        %v573 = vadd.f32 %v558, 1.0
        %v574 = vadd.f32 %v560, 1.0
        %v575 = vadd.f32 %v562, 1.0
        %v576 = vadd.f32 %v564, 1.0
        %v577 = vadd.f32 %v566, 1.0
        %v578 = vadd.f32 %v568, 1.0
        %v579 = vadd.f32 %v570, 1.0
        %v580 = vadd.f32 %v572, 1.0
        %v581 = vrcp.pop %v573
        %v582 = vmul.f32 1.0, %v581
        %v583 = vrcp.pop %v574
        %v584 = vmul.f32 1.0, %v583
        %v585 = vrcp.pop %v575
        %v586 = vmul.f32 1.0, %v585
        %v587 = vrcp.pop %v576
        %v588 = vmul.f32 1.0, %v587
        %v589 = vrcp.pop %v577
        %v590 = vmul.f32 1.0, %v589
        %v591 = vrcp.pop %v578
        %v592 = vmul.f32 1.0, %v591
        %v593 = vrcp.pop %v579
        %v594 = vmul.f32 1.0, %v593
        %v595 = vrcp.pop %v580
        %v596 = vmul.f32 1.0, %v595
        %v598 = vsel %vm419, 1.0, 0
        %600 = vmatprep.subr.mxu0 0.0
        %601 = vmatpush1.msra.mxu0 %v258
        %602 = vmatprep.subr.mxu0 0.0
        %603 = vmatpush1.msra.mxu0 %v259
        %604 = vmatprep.subr.mxu0 0.0
        %605 = vmatpush1.msra.mxu0 %v260
        %606 = vmatprep.subr.mxu0 0.0
        %607 = vmatpush1.msra.mxu0 %v261
        %608 = vmatprep.subr.mxu0 0.0
        %609 = vmatpush1.msra.mxu0 %v262
        %610 = vmatprep.subr.mxu0 0.0
        %611 = vmatpush1.msra.mxu0 %v263
        %612 = vmatprep.subr.mxu0 0.0
        %613 = vmatpush1.msra.mxu0 %v264
        %614 = vmatprep.subr.mxu0 0.0
        %615 = vmatpush1.msra.mxu0 %v265
        %616 = vmatprep.subr.mxu0 0.0
        %617 = vmatpush1.msra.mxu0 0.0
        %618 = vmatprep.subr.mxu0 0.0
        %619 = vmatpush1.msra.mxu0 0.0
        %620 = vmatprep.subr.mxu0 0.0
        %621 = vmatpush1.msra.mxu0 0.0
        %622 = vmatprep.subr.mxu0 0.0
        %623 = vmatpush1.msra.mxu0 0.0
        %624 = vmatprep.subr.mxu0 0.0
        %625 = vmatpush1.msra.mxu0 0.0
        %626 = vmatprep.subr.mxu0 0.0
        %627 = vmatpush1.msra.mxu0 0.0
        %628 = vmatprep.subr.mxu0 0.0
        %629 = vmatpush1.msra.mxu0 0.0
        %630 = vmatprep.subr.mxu0 0.0
        %631 = vmatpush1.msra.mxu0 0.0
        %632 = vmatprep.subr.mxu0 0.0
        %633 = vmatpush1.msra.mxu0 0.0
        %634 = vmatprep.subr.mxu0 0.0
        %635 = vmatpush1.msra.mxu0 0.0
        %636 = vmatprep.subr.mxu0 0.0
        %637 = vmatpush1.msra.mxu0 0.0
        %638 = vmatprep.subr.mxu0 0.0
        %639 = vmatpush1.msra.mxu0 0.0
        %640 = vmatprep.subr.mxu0 0.0
        %641 = vmatpush1.msra.mxu0 0.0
        %642 = vmatprep.subr.mxu0 0.0
        %643 = vmatpush1.msra.mxu0 0.0
        %644 = vmatprep.subr.mxu0 0.0
        %645 = vmatpush1.msra.mxu0 0.0
        %646 = vmatprep.subr.mxu0 0.0
        %647 = vmatpush1.msra.mxu0 0.0
        %648 = vmatprep.subr.mxu0 0.0
        %649 = vmatpush1.msra.mxu0 0.0
        %650 = vmatprep.subr.mxu0 0.0
        %651 = vmatpush1.msra.mxu0 0.0
        %652 = vmatprep.subr.mxu0 0.0
        %653 = vmatpush1.msra.mxu0 0.0
        %654 = vmatprep.subr.mxu0 0.0
        %655 = vmatpush1.msra.mxu0 0.0
        %656 = vmatprep.subr.mxu0 0.0
        %657 = vmatpush1.msra.mxu0 0.0
        %658 = vmatprep.subr.mxu0 0.0
        %659 = vmatpush1.msra.mxu0 0.0
        %660 = vmatprep.subr.mxu0 0.0
        %661 = vmatpush1.msra.mxu0 0.0
        %662 = vmatprep.subr.mxu0 0.0
        %663 = vmatpush1.msra.mxu0 0.0
        %664 = vmatprep.mubr.f32.mxu0 0.0
        %665 = vmatmul.mubr.f32.gmra.mrb[0].mxu0 %v598
        %v666 = vpop.f32.mrb[0].mxu0
        %v667 = vadd.f32 0.0, %v666
        %v668 = vpop.f32.mrb[0].mxu0
        %669 = vdwg.mxu0
        %v670 = vmax.f32 %v258, %v262
        %v671 = vmax.f32 %v259, %v263
        %v672 = vmax.f32 %v260, %v264
        %v673 = vmax.f32 %v261, %v265
        %v674 = vmax.f32 %v670, %v671
        %v675 = vmax.f32 %v672, %v673
        %v676 = vmax.f32 %v674, %v675
        %v677 = vrot.slane %v676, 4
        %v678 = vmax.f32 %v676, %v677
        %v679 = vrot.slane %v678, 2
        %v680 = vmax.f32 %v678, %v679
        %v681 = vrot.slane %v680, 1
        %v682 = vmax.f32 %v680, %v681
        %v683 = vmul.f32 %v667, 0.015625
        %vm684 = vcmask 1040384
        %v685 = vsel %vm684, %v683, %v682
        %v686 = vlaneseq
        %v687 = vand.u32 %v686, 127
        %v688 = vlaneseq
        %v689 = vshrl.u32 %v688, 7
        %vm690 = vcmp.eq.s32.totalorder %v689, 0
        %s691 = sld [smem:[#allocation7]]
        %s692 = sld [smem:[#allocation7 + $0x80]]
        %v693 = vstv %s691
        %v694 = vstv %s692
        %v695 = vsel %vm690, %v693, %v694
        %v696 = vadd.s32 %v687, 4294967293
        %vm697 = vcmp.ge.s32.totalorder %v696, 0
        %vm698 = vcmp.lt.s32.totalorder %v696, 128
        %vm699 = vmand %vm697, %vm698
        %700 = vrot.lane.b32.xlu0 %v685, 3
        %v701 = vpop.permute.xlu0 %700
        %v702 = vsel %vm699, 1, 0
        %vm703 = vcmp.eq.s32.totalorder %v702, 1
        %v704 = vsel %vm703, %v701, 0.0
        %v705 = vmul.f32 %v695, %v704
        %v706 = vadd.f32 %v705, 0.0
        %s707 = sld [smem:[#allocation7 + $0x1]]
        %s708 = sld [smem:[#allocation7 + $0x81]]
        %v709 = vstv %s707
        %v710 = vstv %s708
        %v711 = vsel %vm690, %v709, %v710
        %v712 = vadd.s32 %v687, 4294967294
        %vm713 = vcmp.ge.s32.totalorder %v712, 0
        %vm714 = vcmp.lt.s32.totalorder %v712, 128
        %vm715 = vmand %vm713, %vm714
        %716 = vrot.lane.b32.xlu0 %v685, 2
        %v717 = vpop.permute.xlu0 %716
        %v718 = vsel %vm715, 1, 0
        %vm719 = vcmp.eq.s32.totalorder %v718, 1
        %v720 = vsel %vm719, %v717, 0.0
        %v721 = vmul.f32 %v711, %v720
        %v722 = vadd.f32 %v706, %v721
        %s723 = sld [smem:[#allocation7 + $0x2]]
        %s724 = sld [smem:[#allocation7 + $0x82]]
        %v725 = vstv %s723
        %v726 = vstv %s724
        %v727 = vsel %vm690, %v725, %v726
        %v728 = vadd.s32 %v687, 4294967295
        %vm729 = vcmp.ge.s32.totalorder %v728, 0
        %vm730 = vcmp.lt.s32.totalorder %v728, 128
        %vm731 = vmand %vm729, %vm730
        %732 = vrot.lane.b32.xlu0 %v685, 1
        %v733 = vpop.permute.xlu0 %732
        %v734 = vsel %vm731, 1, 0
        %vm735 = vcmp.eq.s32.totalorder %v734, 1
        %v736 = vsel %vm735, %v733, 0.0
        %v737 = vmul.f32 %v727, %v736
        %v738 = vadd.f32 %v722, %v737
        %s739 = sld [smem:[#allocation7 + $0x3]]
        %s740 = sld [smem:[#allocation7 + $0x83]]
        %v741 = vstv %s739
        %v742 = vstv %s740
        %v743 = vsel %vm690, %v741, %v742
        %v744 = vmul.f32 %v743, %v685
        %v745 = vadd.f32 %v738, %v744
        %s746 = sld [smem:[#allocation7 + $0x4]]
        %s747 = sld [smem:[#allocation7 + $0x84]]
        %v748 = vstv %s746
        %v749 = vstv %s747
        %v750 = vsel %vm690, %v748, %v749
        %v751 = vadd.s32 %v687, 1
        %vm752 = vcmp.ge.s32.totalorder %v751, 0
        %vm753 = vcmp.lt.s32.totalorder %v751, 128
        %vm754 = vmand %vm752, %vm753
        %755 = vrot.lane.b32.xlu0 %v685, 127
        %v756 = vpop.permute.xlu0 %755
        %v757 = vsel %vm754, 1, 0
        %vm758 = vcmp.eq.s32.totalorder %v757, 1
        %v759 = vsel %vm758, %v756, 0.0
        %v760 = vmul.f32 %v750, %v759
        %v761 = vadd.f32 %v745, %v760
        %s762 = sld [smem:[#allocation7 + $0x5]]
        %s763 = sld [smem:[#allocation7 + $0x85]]
        %v764 = vstv %s762
        %v765 = vstv %s763
        %v766 = vsel %vm690, %v764, %v765
        %v767 = vadd.s32 %v687, 2
        %vm768 = vcmp.ge.s32.totalorder %v767, 0
        %vm769 = vcmp.lt.s32.totalorder %v767, 128
        %vm770 = vmand %vm768, %vm769
        %771 = vrot.lane.b32.xlu0 %v685, 126
        %v772 = vpop.permute.xlu0 %771
        %v773 = vsel %vm770, 1, 0
        %vm774 = vcmp.eq.s32.totalorder %v773, 1
        %v775 = vsel %vm774, %v772, 0.0
        %v776 = vmul.f32 %v766, %v775
        %v777 = vadd.f32 %v761, %v776
        %s778 = sld [smem:[#allocation7 + $0x6]]
        %s779 = sld [smem:[#allocation7 + $0x86]]
        %v780 = vstv %s778
        %v781 = vstv %s779
        %v782 = vsel %vm690, %v780, %v781
        %v783 = vadd.s32 %v687, 3
        %vm784 = vcmp.ge.s32.totalorder %v783, 0
        %vm785 = vcmp.lt.s32.totalorder %v783, 128
        %vm786 = vmand %vm784, %vm785
        %787 = vrot.lane.b32.xlu0 %v685, 125
        %v788 = vpop.permute.xlu0 %787
        %v789 = vsel %vm786, 1, 0
        %vm790 = vcmp.eq.s32.totalorder %v789, 1
        %v791 = vsel %vm790, %v788, 0.0
        %v792 = vmul.f32 %v782, %v791
        %v793 = vadd.f32 %v777, %v792
        %vm794 = vcmask 1041408
        %v795 = vsel %vm794, %v793, 0.0
        %v796 = vrot.slane %v795, 4
        %v797 = vadd.f32 %v795, %v796
        %v798 = vrot.slane %v797, 2
        %v799 = vadd.f32 %v797, %v798
        %v800 = vrot.slane %v799, 1
        %v801 = vadd.f32 %v799, %v800
        %s802 = sld [smem:[#allocation2]]
        %v803 = vstv %s802
        %v804 = vadd.f32 %v801, %v803
        %v805 = vxor.u32 %v804, 2147483648
        %v806 = vmul.f32 %v805, 1.442695
        %v807 = vpow.pop %v806
        %v808 = vadd.f32 %v807, 1.0
        %v809 = vrcp.pop %v808
        %v810 = vmul.f32 1.0, %v809
        %812 = vset.pattern.permute.xlu0 0
        %813 = vperm.xlu0 %812, %v582
        %v814 = vpop.permute.xlu0 %813
        %817 = vset.pattern.permute.xlu0 0
        %818 = vperm.xlu0 %817, %v584
        %v819 = vpop.permute.xlu0 %818
        %822 = vset.pattern.permute.xlu0 0
        %823 = vperm.xlu0 %822, %v586
        %v824 = vpop.permute.xlu0 %823
        %827 = vset.pattern.permute.xlu0 0
        %828 = vperm.xlu0 %827, %v588
        %v829 = vpop.permute.xlu0 %828
        %832 = vset.pattern.permute.xlu0 0
        %833 = vperm.xlu0 %832, %v590
        %v834 = vpop.permute.xlu0 %833
        %837 = vset.pattern.permute.xlu0 0
        %838 = vperm.xlu0 %837, %v592
        %v839 = vpop.permute.xlu0 %838
        %842 = vset.pattern.permute.xlu0 0
        %843 = vperm.xlu0 %842, %v594
        %v844 = vpop.permute.xlu0 %843
        %847 = vset.pattern.permute.xlu0 0
        %848 = vperm.xlu0 %847, %v596
        %v849 = vpop.permute.xlu0 %848
        %v851 = vmul.f32 %v258, %v814
        %v852 = vmul.f32 %v259, %v819
        %v853 = vmul.f32 %v260, %v824
        %v854 = vmul.f32 %v261, %v829
        %v855 = vmul.f32 %v262, %v834
        %v856 = vmul.f32 %v263, %v839
        %v857 = vmul.f32 %v264, %v844
        %v858 = vmul.f32 %v265, %v849
        %v859 = vmul.f32 %v851, %v810
        %v860 = vmul.f32 %v852, %v810
        %v861 = vmul.f32 %v853, %v810
        %v862 = vmul.f32 %v854, %v810
        %v863 = vmul.f32 %v855, %v810
        %v864 = vmul.f32 %v856, %v810
        %v865 = vmul.f32 %v857, %v810
        %v866 = vmul.f32 %v858, %v810
        %867 = vst [vmem:[%s257] sm:$0xff] %v859
        %868 = vst [vmem:[%s257 + $0x8] sm:$0xff] %v860
        %869 = vst [vmem:[%s257 + $0x10] sm:$0xff] %v861
        %870 = vst [vmem:[%s257 + $0x18] sm:$0xff] %v862
        %871 = vst [vmem:[%s257 + $0x20] sm:$0xff] %v863
        %872 = vst [vmem:[%s257 + $0x28] sm:$0xff] %v864
        %873 = vst [vmem:[%s257 + $0x30] sm:$0xff] %v865
        %874 = vst [vmem:[%s257 + $0x38] sm:$0xff] %v866
        %s875 = sand.u32 %s142, 1
        %s876 = scalar_lea.sflag [#allocation5], %s875
        %s877 = sand.u32 %s142, 1
        %s878 = smul.addr %s877, 64
        %s879 = scalar_lea.vmem [#allocation8], %s878
        // Predicated region
        $region49: #{tpu_custom_call.1} parent=39 // pred_check
          %p880 = pneg %p152
        $region50: #{tpu_custom_call.1} parent=39 // pred_check_branch
          %882 = sbr.rel (%p880) target = $region52
        $region51: #{tpu_custom_call.1} parent=39 // pred_region
          %s884 = ssub.s32 1024, 1024
          %885 = vsyncadd %s876, %s884
          %s886 = smul.addr %s24, 8
          %s887 = smul.addr %s886, 128
          %s888 = scalar_lea.hbm %s5, %s887
          %s889 = sshll.u32 %s879, 4
          %s890 = int_to_ptr.vmem [resolvable:$true] %s889
          %895 = dma.vmem_to_hbm [thread:$0]  %s890, 1024, %s888, %s876, 128, 128, 8
        $region52: #{tpu_custom_call.1} parent=39 // pred_fallthru
          _
      $region40: #{tpu_custom_call.1} parent=5 // pred_fallthru
        _
      %p896 = scmp.le.s32.totalorder 2, %s19
      // Predicated region
      $region53: #{tpu_custom_call.1} parent=5 // pred_check
        %p897 = pneg %p896
      $region54: #{tpu_custom_call.1} parent=5 // pred_check_branch
        %899 = sbr.rel (%p897) target = $region56
      $region55: #{tpu_custom_call.1} parent=5 // pred_region
        %s900 = ssub.s32 %s19, 2
        // Predicated region
        $region57: #{tpu_custom_call.1} parent=55 // pred_check
          %p901 = pneg %p158
        $region58: #{tpu_custom_call.1} parent=55 // pred_check_branch
          %903 = sbr.rel (%p901) target = $region60
        $region59: #{tpu_custom_call.1} parent=55 // pred_region
          %s904 = sand.u32 %s143, 1
          %s905 = scalar_lea.sflag [#allocation5], %s904
          %s906 = sand.u32 %s143, 1
          %s907 = smul.addr %s906, 64
          %s908 = scalar_lea.vmem [#allocation8], %s907
          %909 = dma.done %s905, 1024
        $region60: #{tpu_custom_call.1} parent=55 // pred_fallthru
          _
      $region56: #{tpu_custom_call.1} parent=5 // pred_fallthru
        _
    $region6: #{tpu_custom_call.1} parent=1 // loop_footer
      %s23 = sadd.s32 1, %s19
    $region7: #{tpu_custom_call.1} parent=1 // loop_footer_branch
      %18 = sbr.rel target = $region3
    $region8: #{tpu_custom_call.1} parent=1 // loop_exit
      _
    %910 = vsyncpa [#allocation4], 1
    %s911 = scalar_lea.sflag [#allocation4], 1
    %912 = vsyncpa %s911, 1
    %913 = vsyncpa [#allocation5], 1
    %s914 = scalar_lea.sflag [#allocation5], 1
    %915 = vsyncpa %s914, 1
    %916 = vsyncpa [#allocation6], 1
    %s917 = scalar_lea.sflag [#allocation6], 1
    %918 = vsyncpa %s917, 1

</llo_original>
